<compile_context>
chip_gen: v7x
topology: tpu7x:2x2x1
jax: 0.10.0
libtpu: 0.0.40
codegen_flags: <defaults>
</compile_context>

<pallas_src>
import functools

import jax
import jax.numpy as jnp
from jax import lax
from jax.experimental import pallas as pl
from jax.experimental.pallas import tpu as pltpu

EPS = 1e-5


def _round_up(x, m):
    return (x + m - 1) // m * m


def _row_tile(rows, target=512):
    tr = min(target, _round_up(rows, 8))
    return tr, _round_up(rows, tr)


# ---------------------------------------------------------------------------
# Kernel 1: input projection  (Linear -> LayerNorm -> ReLU)   [Dropout = id]
# Row-gridded; weights bf16, LN statistics f32.
# ---------------------------------------------------------------------------
def _input_proj_kernel(x_ref, w_ref, b_ref, g_ref, be_ref, o_ref):
    y = jnp.dot(x_ref[...].astype(jnp.bfloat16), w_ref[...],
                preferred_element_type=jnp.float32) + b_ref[...]
    mu = jnp.mean(y, axis=-1, keepdims=True)
    var = jnp.mean((y - mu) ** 2, axis=-1, keepdims=True)
    y = (y - mu) * lax.rsqrt(var + EPS) * g_ref[...] + be_ref[...]
    o_ref[...] = jnp.maximum(y, 0.0)


def input_proj(x, w, b, g, be):
    R, F = x.shape
    H = w.shape[1]
    TR, Rp = _row_tile(R)
    if Rp != R:
        x = jnp.pad(x, ((0, Rp - R), (0, 0)))
    const = lambda i: (0, 0)
    out = pl.pallas_call(
        _input_proj_kernel,
        out_shape=jax.ShapeDtypeStruct((Rp, H), jnp.float32),
        grid=(Rp // TR,),
        in_specs=[
            pl.BlockSpec((TR, F), lambda i: (i, 0)),
            pl.BlockSpec((F, H), const),
            pl.BlockSpec((1, H), const),
            pl.BlockSpec((1, H), const),
            pl.BlockSpec((1, H), const),
        ],
        out_specs=pl.BlockSpec((TR, H), lambda i: (i, 0)),
        compiler_params=pltpu.CompilerParams(dimension_semantics=("parallel",)),
    )(x, w, b, g, be)
    return out[:R]


# ---------------------------------------------------------------------------
# Kernel 2: per-timestep stack of residual GCN blocks
#   h <- relu(BN(A_hat @ (h @ W_l) + b_l)) + h        (num_layers times)
# Grid iterates (in parallel) over the seq_length overlapping windows.  The
# window rows are DMA'd straight from the projected-feature HBM buffer — no
# S-fold "windows" tensor is materialized.
# ---------------------------------------------------------------------------
def _gcn_stack_kernel(a_ref, gw_ref, gb_ref, bng_ref, bnbe_ref, bnrm_ref, bnrv_ref,
                      x_hbm, o_ref, xbuf, sem, *, num_layers, num_nodes):
    t = pl.program_id(0)
    start = pl.multiple_of(t * num_nodes, num_nodes)
    n_rows = xbuf.shape[0]
    cp = pltpu.make_async_copy(x_hbm.at[pl.ds(start, n_rows)], xbuf, sem.at[0])
    cp.start()
    a = a_ref[...]                                   # (N, N) bf16, resident
    cp.wait()

    h = xbuf[...]                                    # (N, H) f32
    for l in range(num_layers):
        identity = h
        xw = jnp.dot(h.astype(jnp.bfloat16), gw_ref[l],
                     preferred_element_type=jnp.float32)
        m = jnp.dot(a, xw.astype(jnp.bfloat16),
                    preferred_element_type=jnp.float32) + gb_ref[l]
        # BatchNorm1d (eval: running stats), f32
        m = (m - bnrm_ref[l]) * lax.rsqrt(bnrv_ref[l] + EPS) * bng_ref[l] + bnbe_ref[l]
        h = jnp.maximum(m, 0.0) + identity           # ReLU ; Dropout = identity
    o_ref[0] = h


def gcn_stack(a_hat_bf16, xp_flat, seq_length, num_nodes,
              g_w, g_b, bn_g, bn_be, bn_rm, bn_rv):
    N = a_hat_bf16.shape[0]
    L, H = g_w.shape[0], g_w.shape[2]

    # VMEM budget (A_hat is held resident per grid step).
    a_bytes = N * N * 2
    act_bytes = N * H * 4
    w_bytes = L * H * H * 2 + 5 * L * H * 4
    needed = 2 * a_bytes + 6 * act_bytes + 2 * w_bytes + (2 << 20)
    # TODO(synk): for large N (v7x has only 64 MiB VMEM) stream A_hat as row
    # panels with an extra grid axis instead of holding the whole (N, N) tile.
    assert needed < 56 * (1 << 20), "A_hat too large for a single resident VMEM tile"
    vmem_limit = int(min(max(needed, 16 * (1 << 20)), 64 * (1 << 20)))

    const3 = lambda t: (0, 0, 0)
    kernel = functools.partial(_gcn_stack_kernel, num_layers=L, num_nodes=num_nodes)
    return pl.pallas_call(
        kernel,
        out_shape=jax.ShapeDtypeStruct((seq_length, N, H), jnp.float32),
        grid=(seq_length,),
        in_specs=[
            pl.BlockSpec((N, N), lambda t: (0, 0)),
            pl.BlockSpec((L, H, H), const3),
            pl.BlockSpec((L, 1, H), const3),
            pl.BlockSpec((L, 1, H), const3),
            pl.BlockSpec((L, 1, H), const3),
            pl.BlockSpec((L, 1, H), const3),
            pl.BlockSpec((L, 1, H), const3),
            pl.BlockSpec(memory_space=pl.ANY),       # projected features in HBM
        ],
        out_specs=pl.BlockSpec((1, N, H), lambda t: (t, 0, 0)),
        scratch_shapes=[pltpu.VMEM((N, H), jnp.float32),
                        pltpu.SemaphoreType.DMA((1,))],
        compiler_params=pltpu.CompilerParams(
            dimension_semantics=("parallel",), vmem_limit_bytes=vmem_limit),
    )(a_hat_bf16, g_w, g_b, bn_g, bn_be, bn_rm, bn_rv, xp_flat)


# ---------------------------------------------------------------------------
# Kernel 3a: LSTM layer-1 input projection hoisted out of the recurrence
#   gates_x1 = X @ W_ih1 + (b_ih1 + b_hh1)     (one big MXU matmul, row-gridded)
# ---------------------------------------------------------------------------
def _linear_bias_kernel(x_ref, w_ref, b_ref, o_ref):
    o_ref[...] = jnp.dot(x_ref[...].astype(jnp.bfloat16), w_ref[...],
                         preferred_element_type=jnp.float32) + b_ref[...]


def linear_bias(x, w, b):
    R, K = x.shape
    Nc = w.shape[1]
    TR, Rp = _row_tile(R)
    if Rp != R:
        x = jnp.pad(x, ((0, Rp - R), (0, 0)))
    const = lambda i: (0, 0)
    out = pl.pallas_call(
        _linear_bias_kernel,
        out_shape=jax.ShapeDtypeStruct((Rp, Nc), jnp.float32),
        grid=(Rp // TR,),
        in_specs=[pl.BlockSpec((TR, K), lambda i: (i, 0)),
                  pl.BlockSpec((K, Nc), const),
                  pl.BlockSpec((1, Nc), const)],
        out_specs=pl.BlockSpec((TR, Nc), lambda i: (i, 0)),
        compiler_params=pltpu.CompilerParams(dimension_semantics=("parallel",)),
    )(x, w, b)
    return out[:R]


# ---------------------------------------------------------------------------
# Kernel 3b: 2-layer LSTM recurrence; returns last-timestep hidden of layer 2.
# Grid = (row_tiles, S): rows parallel (megacore on v7x), time "arbitrary";
# h/c state lives in scratch and persists across the time axis.  Gate weights
# are per-gate (no sub-vreg lane slicing inside the serial loop); layer-2 x/h
# matmuls are fused via a [h1_t, h2_prev] concat against stacked (2H, H) blocks.
# ---------------------------------------------------------------------------
def _lstm_rec_kernel(gx_ref, whh1_ref, w2_ref, b2_ref, o_ref, h1, c1, h2, c2):
    t = pl.program_id(1)

    @pl.when(t == 0)
    def _():
        h1[...] = jnp.zeros_like(h1)
        c1[...] = jnp.zeros_like(c1)
        h2[...] = jnp.zeros_like(h2)
        c2[...] = jnp.zeros_like(c2)

    def lstm_gates(c_prev, g):
        i = jax.nn.sigmoid(g[0])
        f = jax.nn.sigmoid(g[1])
        gg = jnp.tanh(g[2])
        o = jax.nn.sigmoid(g[3])
        c_new = f * c_prev + i * gg
        return o * jnp.tanh(c_new), c_new

    # layer 1 — x-part (and bias) precomputed; only h @ W_hh in the serial chain
    h1b = h1[...].astype(jnp.bfloat16)
    g1 = [gx_ref[0, k] + jnp.dot(h1b, whh1_ref[k], preferred_element_type=jnp.float32)
          for k in range(4)]
    h1n, c1n = lstm_gates(c1[...], g1)
    h1[...] = h1n
    c1[...] = c1n

    # layer 2 — fused [x_t, h_prev] @ [W_ih; W_hh] per gate (inter-layer dropout = id)
    inp = jnp.concatenate([h1n, h2[...]], axis=-1).astype(jnp.bfloat16)   # (TM, 2H)
    g2 = [jnp.dot(inp, w2_ref[k], preferred_element_type=jnp.float32) + b2_ref[k]
          for k in range(4)]
    h2n, c2n = lstm_gates(c2[...], g2)
    h2[...] = h2n
    c2[...] = c2n

    o_ref[...] = h2n      # output block resident across t; flushed after last step


def lstm2_last(gx, whh1, w2, b2):
    S, _, M, H = gx.shape
    row_tiles = 2 if (M % 16 == 0) else 1
    TM = M // row_tiles
    const3 = lambda r, t: (0, 0, 0)
    return pl.pallas_call(
        _lstm_rec_kernel,
        out_shape=jax.ShapeDtypeStruct((M, H), jnp.float32),
        grid=(row_tiles, S),
        in_specs=[
            pl.BlockSpec((1, 4, TM, H), lambda r, t: (t, 0, r, 0)),
            pl.BlockSpec((4, H, H), const3),
            pl.BlockSpec((4, 2 * H, H), const3),
            pl.BlockSpec((4, 1, H), const3),
        ],
        out_specs=pl.BlockSpec((TM, H), lambda r, t: (r, 0)),
        scratch_shapes=[pltpu.VMEM((TM, H), jnp.float32) for _ in range(4)],
        compiler_params=pltpu.CompilerParams(
            dimension_semantics=("parallel", "arbitrary")),
    )(gx, whh1, w2, b2)


# ---------------------------------------------------------------------------
# Kernel 4: output projection (Linear -> LayerNorm -> ReLU -> Linear[padded])
# Final Linear is padded to a lane-dense 128-wide output; sliced in wrapper.
# ---------------------------------------------------------------------------
def _output_proj_kernel(x_ref, w1_ref, b1_ref, g_ref, be_ref, w2_ref, b2_ref, o_ref):
    y = jnp.dot(x_ref[...].astype(jnp.bfloat16), w1_ref[...],
                preferred_element_type=jnp.float32) + b1_ref[...]
    mu = jnp.mean(y, axis=-1, keepdims=True)
    var = jnp.mean((y - mu) ** 2, axis=-1, keepdims=True)
    y = (y - mu) * lax.rsqrt(var + EPS) * g_ref[...] + be_ref[...]
    y = jnp.maximum(y, 0.0)                                   # Dropout = identity
    o_ref[...] = jnp.dot(y.astype(jnp.bfloat16), w2_ref[...],
                         preferred_element_type=jnp.float32) + b2_ref[...]


def output_proj(x, w1, b1, g, be, w2p, b2p):
    R, H = x.shape
    H2 = w1.shape[1]
    OP = w2p.shape[1]
    TR, Rp = _row_tile(R)
    if Rp != R:
        x = jnp.pad(x, ((0, Rp - R), (0, 0)))
    const = lambda i: (0, 0)
    out = pl.pallas_call(
        _output_proj_kernel,
        out_shape=jax.ShapeDtypeStruct((Rp, OP), jnp.float32),
        grid=(Rp // TR,),
        in_specs=[pl.BlockSpec((TR, H), lambda i: (i, 0)),
                  pl.BlockSpec((H, H2), const),
                  pl.BlockSpec((1, H2), const),
                  pl.BlockSpec((1, H2), const),
                  pl.BlockSpec((1, H2), const),
                  pl.BlockSpec((H2, OP), const),
                  pl.BlockSpec((1, OP), const)],
        out_specs=pl.BlockSpec((TR, OP), lambda i: (i, 0)),
        compiler_params=pltpu.CompilerParams(dimension_semantics=("parallel",)),
    )(x, w1, b1, g, be, w2p, b2p)
    return out[:R]


# ---------------------------------------------------------------------------
# Glue: edge attention MLP (tiny), adjacency normalization, parameter init.
# ---------------------------------------------------------------------------
def edge_attention(edge_features, p):
    # Linear(1,H) -> ReLU -> Linear(H,1) -> Sigmoid -> squeeze(-1)    (tiny; glue)
    e = jnp.maximum(edge_features @ p['ef_w1'] + p['ef_b1'], 0.0)
    e = e @ p['ef_w2'] + p['ef_b2']
    return jax.nn.sigmoid(e)[:, 0]


def _uniform(key, shape, bound):
    return jax.random.uniform(key, shape, jnp.float32, -bound, bound)


def _linear_params(key, fan_in, fan_out):
    k1, k2 = jax.random.split(key)
    bound = 1.0 / (fan_in ** 0.5)
    return _uniform(k1, (fan_in, fan_out), bound), _uniform(k2, (1, fan_out), bound)


def init_params(key, input_dim, hidden, output_dim, num_layers):
    keys = jax.random.split(key, 8)
    H = hidden
    out_pad = _round_up(output_dim, 128)
    p = {'hidden_dim': H, 'num_layers': num_layers, 'output_dim': output_dim}

    # input_proj
    w, b = _linear_params(keys[0], input_dim, H)
    p['ip_w'], p['ip_b'] = w.astype(jnp.bfloat16), b
    p['ip_g'] = jnp.ones((1, H), jnp.float32)
    p['ip_be'] = jnp.zeros((1, H), jnp.float32)
    # edge_feature_proj
    p['ef_w1'], p['ef_b1'] = _linear_params(keys[1], 1, H)
    p['ef_w2'], p['ef_b2'] = _linear_params(keys[2], H, 1)
    # GCNConv weights (glorot, (in,out)); bias zeros (PyG default); BN defaults
    gk = jax.random.split(keys[3], num_layers)
    gb = (6.0 / (H + H)) ** 0.5
    p['g_w'] = jnp.stack([_uniform(k, (H, H), gb) for k in gk]).astype(jnp.bfloat16)
    p['g_b'] = jnp.zeros((num_layers, 1, H), jnp.float32)
    p['bn_g'] = jnp.ones((num_layers, 1, H), jnp.float32)
    p['bn_be'] = jnp.zeros((num_layers, 1, H), jnp.float32)
    p['bn_rm'] = jnp.zeros((num_layers, 1, H), jnp.float32)
    p['bn_rv'] = jnp.ones((num_layers, 1, H), jnp.float32)
    # 2-layer LSTM (layer-1 x-proj weight (H,4H); per-gate W_hh1 (4,H,H);
    # layer-2 per-gate stacked [W_ih; W_hh] (4,2H,H); biases = b_ih + b_hh)
    kb = 1.0 / (H ** 0.5)
    lk = jax.random.split(keys[4], 7)
    p['l1_wih'] = _uniform(lk[0], (H, 4 * H), kb).astype(jnp.bfloat16)
    p['l1_whh'] = _uniform(lk[1], (4, H, H), kb).astype(jnp.bfloat16)
    p['l1_b'] = _uniform(lk[2], (1, 4 * H), kb) + _uniform(lk[3], (1, 4 * H), kb)
    p['l2_w'] = _uniform(lk[4], (4, 2 * H, H), kb).astype(jnp.bfloat16)
    p['l2_b'] = _uniform(lk[5], (4, 1, H), kb) + _uniform(lk[6], (4, 1, H), kb)
    # output_projection (final Linear padded to lane-dense width)
    w1, b1 = _linear_params(keys[5], H, H // 2)
    p['op_w1'], p['op_b1'] = w1.astype(jnp.bfloat16), b1
    p['op_g'] = jnp.ones((1, H // 2), jnp.float32)
    p['op_be'] = jnp.zeros((1, H // 2), jnp.float32)
    w2, b2 = _linear_params(keys[6], H // 2, output_dim)
    p['op_w2'] = jnp.pad(w2, ((0, 0), (0, out_pad - output_dim))).astype(jnp.bfloat16)
    p['op_b2'] = jnp.pad(b2, ((0, 0), (0, out_pad - output_dim)))
    return p


def gcn_forward(p, x, edge_index, edge_weights=None, edge_features=None):
    B, S, Nn, F = x.shape
    H = p['hidden_dim']

    # edge attention -> effective edge weights (tiny MLP, glue)
    if edge_features is not None:
        att = edge_attention(edge_features.astype(jnp.float32), p)
        edge_weights = att if edge_weights is None else edge_weights * att
    if edge_weights is None:
        edge_weights = jnp.ones((edge_index.shape[1],), jnp.float32)

    # dense symmetric-normalized adjacency over N = B*Nn rows, matching the
    # reference (edge ids only touch nodes 0..Nn-1; every row gets a self-loop).
    # TODO(synk): sparse scatter-based message passing done as dense A_hat matmul.
    N = B * Nn
    row, col = edge_index[0], edge_index[1]
    deg = jnp.zeros((N,), jnp.float32).at[col].add(edge_weights) + 1.0
    dis = lax.rsqrt(deg)
    a_hat = jnp.zeros((N, N), jnp.float32).at[col, row].add(dis[row] * edge_weights * dis[col])
    a_hat = (a_hat + jnp.diag(dis * dis)).astype(jnp.bfloat16)

    # input projection (Pallas, row-tiled)
    xp = input_proj(x.reshape(-1, F).astype(jnp.float32),
                    p['ip_w'], p['ip_b'], p['ip_g'], p['ip_be'])       # (B*S*Nn, H)

    # residual GCN blocks per overlapping timestep window (Pallas, parallel grid
    # over S; window rows t*Nn..t*Nn+N DMA'd straight from xp — no window tensor)
    h_all = gcn_stack(a_hat, xp, S, Nn, p['g_w'], p['g_b'],
                      p['bn_g'], p['bn_be'], p['bn_rm'], p['bn_rv'])   # (S, N, H)

    # same ordering as torch.stack(dim=1).transpose(1,2).reshape(-1, S, H),
    # expressed time-major: (S, M=B*Nn, H)
    M = B * Nn

    # LSTM layer-1 input projection hoisted out of the recurrence (big matmul),
    # rearranged to per-gate slabs (S, 4, M, H) so the serial loop never slices lanes.
    gx = linear_bias(h_all.reshape(S * M, H), p['l1_wih'], p['l1_b'])  # (S*M, 4H)
    gx = gx.reshape(S, M, 4, H).transpose(0, 2, 1, 3)                  # (S, 4, M, H)

    # 2-layer LSTM recurrence, keep last timestep (Pallas)
    last = lstm2_last(gx, p['l1_whh'], p['l2_w'], p['l2_b'])           # (M, H)

    # output projection (Pallas; lane-dense padded output, sliced here)
    out = output_proj(last, p['op_w1'], p['op_b1'], p['op_g'], p['op_be'],
                      p['op_w2'], p['op_b2'])                          # (M, 128)
    out = out[:, :p['output_dim']].reshape(B, Nn, -1)
    if p['output_dim'] == 1:
        out = out[..., None]
    return out


if __name__ == "__main__":
    B, S, Nn, F = 2, 4, 8, 16          # batch, seq_length, num_nodes, input_dim
    H, OUT, L = 32, 3, 4               # hidden_dim, output_dim, num_layers

    root = jax.random.PRNGKey(0)
    kp, kx, kw, kf = jax.random.split(root, 4)
    params = init_params(kp, F, H, OUT, L)

    x = jax.random.normal(kx, (B, S, Nn, F), jnp.float32)
    # bidirectional ring graph over the Nn nodes (no explicit self-loops)
    src = jnp.arange(Nn, dtype=jnp.int32)
    dst = (src + 1) % Nn
    edge_index = jnp.concatenate(
        [jnp.stack([src, dst]), jnp.stack([dst, src])], axis=1)        # (2, 16)
    E = edge_index.shape[1]
    edge_weights = jax.random.uniform(kw, (E,), jnp.float32, 0.5, 1.5)
    edge_features = jax.random.normal(kf, (E, 1), jnp.float32)

    out = gcn_forward(params, x, edge_index, edge_weights, edge_features)
    out = jax.block_until_ready(out)
    assert out.shape == (B, Nn, OUT), out.shape
    assert bool(jnp.all(jnp.isfinite(out)))
    print("KERNEL_OK")
</pallas_src>

<mosaic_0001>
module attributes {stable_mosaic.version = 11 : i64} {
  func.func @_input_proj_kernel(%arg0: i32, %arg1: memref<64x16xf32, #tpu.memory_space<vmem>>, %arg2: memref<16x32xbf16, #tpu.memory_space<vmem>>, %arg3: memref<1x32xf32, #tpu.memory_space<vmem>>, %arg4: memref<1x32xf32, #tpu.memory_space<vmem>>, %arg5: memref<1x32xf32, #tpu.memory_space<vmem>>, %arg6: memref<64x32xf32, #tpu.memory_space<vmem>>) attributes {dimension_semantics = [#tpu.dimension_semantics<parallel>], iteration_bounds = array<i64: 1>, scalar_prefetch = 0 : i64, scratch_operands = 0 : i64, tpu.core_type = #tpu.core_type<tc>, window_params = [{transform_indices = @transform_0, window_bounds = array<i64: 64, 16>}, {pipeline_mode = #tpu.pipeline_mode<synchronous>, transform_indices = @transform_1, window_bounds = array<i64: 16, 32>}, {pipeline_mode = #tpu.pipeline_mode<synchronous>, transform_indices = @transform_2, window_bounds = array<i64: 1, 32>}, {pipeline_mode = #tpu.pipeline_mode<synchronous>, transform_indices = @transform_3, window_bounds = array<i64: 1, 32>}, {pipeline_mode = #tpu.pipeline_mode<synchronous>, transform_indices = @transform_4, window_bounds = array<i64: 1, 32>}, {transform_indices = @transform_5, window_bounds = array<i64: 64, 32>}]} {
    %c0 = arith.constant 0 : index
    %c0_0 = arith.constant 0 : index
    %0 = vector.load %arg1[%c0, %c0_0] : memref<64x16xf32, #tpu.memory_space<vmem>>, vector<64x16xf32>
    %1 = arith.truncf %0 : vector<64x16xf32> to vector<64x16xbf16>
    %c0_1 = arith.constant 0 : index
    %c0_2 = arith.constant 0 : index
    %2 = vector.load %arg2[%c0_1, %c0_2] : memref<16x32xbf16, #tpu.memory_space<vmem>>, vector<16x32xbf16>
    %cst = arith.constant dense<0.000000e+00> : vector<64x32xf32>
    %3 = tpu.matmul %1, %2, %cst {dimension_numbers = #tpu.dot_dimension_numbers<[1], [0], [0], [1], [0, 0, 1, 1], [], []>} : vector<64x16xbf16>, vector<16x32xbf16>, vector<64x32xf32> -> vector<64x32xf32>
    %c0_3 = arith.constant 0 : index
    %c0_4 = arith.constant 0 : index
    %4 = vector.load %arg3[%c0_3, %c0_4] : memref<1x32xf32, #tpu.memory_space<vmem>>, vector<1x32xf32>
    %5 = vector.broadcast %4 : vector<1x32xf32> to vector<64x32xf32>
    %6 = arith.addf %3, %5 : vector<64x32xf32>
    %cst_5 = arith.constant dense<0.000000e+00> : vector<64xf32>
    %7 = vector.multi_reduction <add>, %6, %cst_5 [1] : vector<64x32xf32> to vector<64xf32>
    %8 = vector.shape_cast %7 : vector<64xf32> to vector<64x1xf32>
    %cst_6 = arith.constant 3.200000e+01 : f32
    %9 = vector.broadcast %cst_6 : f32 to vector<64x1xf32>
    %10 = arith.divf %8, %9 : vector<64x1xf32>
    %11 = vector.broadcast %10 : vector<64x1xf32> to vector<64x32xf32>
    %12 = arith.subf %6, %11 : vector<64x32xf32>
    %13 = arith.mulf %12, %12 : vector<64x32xf32>
    %cst_7 = arith.constant dense<0.000000e+00> : vector<64xf32>
    %14 = vector.multi_reduction <add>, %13, %cst_7 [1] : vector<64x32xf32> to vector<64xf32>
    %15 = vector.shape_cast %14 : vector<64xf32> to vector<64x1xf32>
    %cst_8 = arith.constant 3.200000e+01 : f32
    %16 = vector.broadcast %cst_8 : f32 to vector<64x1xf32>
    %17 = arith.divf %15, %16 : vector<64x1xf32>
    %18 = vector.broadcast %10 : vector<64x1xf32> to vector<64x32xf32>
    %19 = arith.subf %6, %18 : vector<64x32xf32>
    %cst_9 = arith.constant 9.99999974E-6 : f32
    %20 = vector.broadcast %cst_9 : f32 to vector<64x1xf32>
    %21 = arith.addf %17, %20 : vector<64x1xf32>
    %22 = math.rsqrt %21 : vector<64x1xf32>
    %23 = vector.broadcast %22 : vector<64x1xf32> to vector<64x32xf32>
    %24 = arith.mulf %19, %23 : vector<64x32xf32>
    %c0_10 = arith.constant 0 : index
    %c0_11 = arith.constant 0 : index
    %25 = vector.load %arg4[%c0_10, %c0_11] : memref<1x32xf32, #tpu.memory_space<vmem>>, vector<1x32xf32>
    %26 = vector.broadcast %25 : vector<1x32xf32> to vector<64x32xf32>
    %27 = arith.mulf %24, %26 : vector<64x32xf32>
    %c0_12 = arith.constant 0 : index
    %c0_13 = arith.constant 0 : index
    %28 = vector.load %arg5[%c0_12, %c0_13] : memref<1x32xf32, #tpu.memory_space<vmem>>, vector<1x32xf32>
    %29 = vector.broadcast %28 : vector<1x32xf32> to vector<64x32xf32>
    %30 = arith.addf %27, %29 : vector<64x32xf32>
    %cst_14 = arith.constant 0.000000e+00 : f32
    %31 = vector.broadcast %cst_14 : f32 to vector<64x32xf32>
    %32 = arith.maximumf %30, %31 : vector<64x32xf32>
    %c0_15 = arith.constant 0 : index
    %c0_16 = arith.constant 0 : index
    %33 = vector.load %arg6[%c0_15, %c0_16] : memref<64x32xf32, #tpu.memory_space<vmem>>, vector<64x32xf32>
    tpu.vector_store %arg6[%c0_15, %c0_16], %32 {strides = array<i32>} : memref<64x32xf32, #tpu.memory_space<vmem>>, vector<64x32xf32>,
    return
  }
  func.func @transform_0(%arg0: i32) -> (i32, i32) {
    %c0_i32 = arith.constant 0 : i32
    %c0_i32_0 = arith.constant 0 : i32
    return %arg0, %c0_i32 : i32, i32
  }
  func.func @transform_1(%arg0: i32) -> (i32, i32) {
    %c0_i32 = arith.constant 0 : i32
    %c0_i32_0 = arith.constant 0 : i32
    %c0_i32_1 = arith.constant 0 : i32
    return %c0_i32, %c0_i32_0 : i32, i32
  }
  func.func @transform_2(%arg0: i32) -> (i32, i32) {
    %c0_i32 = arith.constant 0 : i32
    %c0_i32_0 = arith.constant 0 : i32
    %c0_i32_1 = arith.constant 0 : i32
    return %c0_i32, %c0_i32_0 : i32, i32
  }
  func.func @transform_3(%arg0: i32) -> (i32, i32) {
    %c0_i32 = arith.constant 0 : i32
    %c0_i32_0 = arith.constant 0 : i32
    %c0_i32_1 = arith.constant 0 : i32
    return %c0_i32, %c0_i32_0 : i32, i32
  }
  func.func @transform_4(%arg0: i32) -> (i32, i32) {
    %c0_i32 = arith.constant 0 : i32
    %c0_i32_0 = arith.constant 0 : i32
    %c0_i32_1 = arith.constant 0 : i32
    return %c0_i32, %c0_i32_0 : i32, i32
  }
  func.func @transform_5(%arg0: i32) -> (i32, i32) {
    %c0_i32 = arith.constant 0 : i32
    %c0_i32_0 = arith.constant 0 : i32
    return %arg0, %c0_i32 : i32, i32
  }
}

</mosaic_0001>

<llo_original>
// kernel: tpu_custom_call.1
$region0: #{tpu_custom_call.1}
  #allocation0 [shape = 'u32[]', space=smem, size = 0x4, offset = 0x4, fixed_abs, tag = 'smem constant byte address 0x4 - core index']
  #allocation1 [shape = 'u32[144,128]{1,0:T(1,128)}', space=vmem, size = 0x12000, scoped, tag = 'internal scratch']
  %s0 = inlined_call_operand.vmem [shape: f32[64,16], index: 0, kind: input, shape index: {}]
  %s1 = inlined_call_operand.vmem [shape: bf16[16,32], index: 1, kind: input, shape index: {}]
  %s2 = inlined_call_operand.vmem [shape: f32[1,32], index: 2, kind: input, shape index: {}]
  %s3 = inlined_call_operand.vmem [shape: f32[1,32], index: 3, kind: input, shape index: {}]
  %s4 = inlined_call_operand.vmem [shape: f32[1,32], index: 4, kind: input, shape index: {}]
  %s5 = inlined_call_operand.vmem [shape: f32[64,32], index: 5, kind: output, shape index: {}]
  %s6 = sld [smem:[#allocation0]]
  $region30: #{tpu_custom_call.1} parent=0
    _
  %s8 = ssub.s32 1, %s6
  %s9 = scalar_select 0, %s8, %s6
  // Predicated region
  $region2: #{tpu_custom_call.1} parent=0 // pred_check
    _
  $region3: #{tpu_custom_call.1} parent=0 // pred_check_branch
    %11 = sbr.rel (0) target = $region5
  $region4: #{tpu_custom_call.1} parent=0 // pred_region
    _
  $region5: #{tpu_custom_call.1} parent=0 // pred_fallthru
    _
  // Predicated region
  $region6: #{tpu_custom_call.1} parent=0 // pred_check
    _
  $region7: #{tpu_custom_call.1} parent=0 // pred_check_branch
    %13 = sbr.rel (0) target = $region9
  $region8: #{tpu_custom_call.1} parent=0 // pred_region
    _
  $region9: #{tpu_custom_call.1} parent=0 // pred_fallthru
    _
  // Predicated region
  $region10: #{tpu_custom_call.1} parent=0 // pred_check
    _
  $region11: #{tpu_custom_call.1} parent=0 // pred_check_branch
    %15 = sbr.rel (0) target = $region13
  $region12: #{tpu_custom_call.1} parent=0 // pred_region
    _
  $region13: #{tpu_custom_call.1} parent=0 // pred_fallthru
    _
  // Predicated region
  $region14: #{tpu_custom_call.1} parent=0 // pred_check
    _
  $region15: #{tpu_custom_call.1} parent=0 // pred_check_branch
    %17 = sbr.rel (0) target = $region17
  $region16: #{tpu_custom_call.1} parent=0 // pred_region
    _
  $region17: #{tpu_custom_call.1} parent=0 // pred_fallthru
    _
  // Predicated region
  $region18: #{tpu_custom_call.1} parent=0 // pred_check
    _
  $region19: #{tpu_custom_call.1} parent=0 // pred_check_branch
    %19 = sbr.rel (0) target = $region21
  $region20: #{tpu_custom_call.1} parent=0 // pred_region
    _
  $region21: #{tpu_custom_call.1} parent=0 // pred_fallthru
    _
  %v21 = vld [vmem:[%s0] sm:$0xff]
  %v22 = vld [vmem:[%s0 + $0x8] sm:$0xff]
  %v23 = vld [vmem:[%s0 + $0x10] sm:$0xff]
  %v24 = vld [vmem:[%s0 + $0x18] sm:$0xff]
  %v25 = vld [vmem:[%s0 + $0x20] sm:$0xff]
  %v26 = vld [vmem:[%s0 + $0x28] sm:$0xff]
  %v27 = vld [vmem:[%s0 + $0x30] sm:$0xff]
  %v28 = vld [vmem:[%s0 + $0x38] sm:$0xff]
  %v29 = vpack.c.bf16 %v22, %v21
  %v30 = vpack.c.bf16 %v24, %v23
  %v31 = vpack.c.bf16 %v26, %v25
  %v32 = vpack.c.bf16 %v28, %v27
  %v33 = vld [vmem:[%s1] sm:$0xf]
  %v34 = vld [vmem:[%s1 + $0x4] sm:$0xf]
  %v35 = vld [vmem:[%s2] sm:$0x1]
  %v37 = vlaneseq
  %v38 = vshrl.u32 %v37, 7
  %v39 = vsub.s32 0, %v38
  %v40 = vrot.slane %v35, %v39
  %v44 = vunpack.c.l.b16 %v33
  %v45 = vunpack.c.l.b16 %v34
  %v46 = vpack.c.b16 %v45, %v44
  %vm48 = vcmask 130048
  %v50 = vsel %vm48, %v29, 0
  %v53 = vsel %vm48, %v30, 0
  %v56 = vsel %vm48, %v31, 0
  %v59 = vsel %vm48, %v32, 0
  %61 = vmatprep.subr.bf16.mxu0 0
  %62 = vmatpush1.bf16.msra.mxu0 %v46
  %63 = vmatprep.subr.bf16.mxu0 0
  %64 = vmatpush1.bf16.msra.mxu0 0
  %65 = vmatprep.subr.bf16.mxu0 0
  %66 = vmatpush1.bf16.msra.mxu0 0
  %67 = vmatprep.subr.bf16.mxu0 0
  %68 = vmatpush1.bf16.msra.mxu0 0
  %69 = vmatprep.subr.bf16.mxu0 0
  %70 = vmatpush1.bf16.msra.mxu0 0
  %71 = vmatprep.subr.bf16.mxu0 0
  %72 = vmatpush1.bf16.msra.mxu0 0
  %73 = vmatprep.subr.bf16.mxu0 0
  %74 = vmatpush1.bf16.msra.mxu0 0
  %75 = vmatprep.subr.bf16.mxu0 0
  %76 = vmatpush1.bf16.msra.mxu0 0
  %77 = vmatprep.subr.bf16.mxu0 0
  %78 = vmatpush1.bf16.msra.mxu0 0
  %79 = vmatprep.subr.bf16.mxu0 0
  %80 = vmatpush1.bf16.msra.mxu0 0
  %81 = vmatprep.subr.bf16.mxu0 0
  %82 = vmatpush1.bf16.msra.mxu0 0
  %83 = vmatprep.subr.bf16.mxu0 0
  %84 = vmatpush1.bf16.msra.mxu0 0
  %85 = vmatprep.subr.bf16.mxu0 0
  %86 = vmatpush1.bf16.msra.mxu0 0
  %87 = vmatprep.subr.bf16.mxu0 0
  %88 = vmatpush1.bf16.msra.mxu0 0
  %89 = vmatprep.subr.bf16.mxu0 0
  %90 = vmatpush1.bf16.msra.mxu0 0
  %91 = vmatprep.subr.bf16.mxu0 0
  %92 = vmatpush1.bf16.msra.mxu0 0
  %93 = vmatprep.mubr.bf16.mxu0 0
  %94 = vmatmul.mubr.bf16.gmra.mrb[0].mxu0 %v50
  %v95 = vpop.f32.mrb[0].mxu0
  %v96 = vadd.f32 %v40, %v95
  %v97 = vpop.f32.mrb[0].mxu0
  %v98 = vpop.f32.mrb[0].mxu0
  %v99 = vadd.f32 %v40, %v98
  %v100 = vpop.f32.mrb[0].mxu0
  %101 = vmatprep.mubr.bf16.mxu0 0
  %102 = vmatmul.mubr.bf16.gmra.mrb[0].mxu0 %v53
  %v103 = vpop.f32.mrb[0].mxu0
  %v104 = vadd.f32 %v40, %v103
  %v105 = vpop.f32.mrb[0].mxu0
  %v106 = vpop.f32.mrb[0].mxu0
  %v107 = vadd.f32 %v40, %v106
  %v108 = vpop.f32.mrb[0].mxu0
  %109 = vmatprep.mubr.bf16.mxu0 0
  %110 = vmatmul.mubr.bf16.gmra.mrb[0].mxu0 %v56
  %v111 = vpop.f32.mrb[0].mxu0
  %v112 = vadd.f32 %v40, %v111
  %v113 = vpop.f32.mrb[0].mxu0
  %v114 = vpop.f32.mrb[0].mxu0
  %v115 = vadd.f32 %v40, %v114
  %v116 = vpop.f32.mrb[0].mxu0
  %117 = vmatprep.mubr.bf16.mxu0 0
  %118 = vmatmul.mubr.bf16.gmra.mrb[0].mxu0 %v59
  %v119 = vpop.f32.mrb[0].mxu0
  %v120 = vadd.f32 %v40, %v119
  %v121 = vpop.f32.mrb[0].mxu0
  %v122 = vpop.f32.mrb[0].mxu0
  %v123 = vadd.f32 %v40, %v122
  %v124 = vpop.f32.mrb[0].mxu0
  %125 = vdwg.mxu0
  %vm126 = vcmask 261120
  %v127 = vsel %vm126, %v96, 0.0
  %128 = vadd.xlane.f32.xlu0 %v127
  %v129 = vpop.xlane.xlu0 %128
  %v130 = vsel %vm126, %v99, 0.0
  %131 = vadd.xlane.f32.xlu0 %v130
  %v132 = vpop.xlane.xlu0 %131
  %v133 = vsel %vm126, %v104, 0.0
  %134 = vadd.xlane.f32.xlu0 %v133
  %v135 = vpop.xlane.xlu0 %134
  %v136 = vsel %vm126, %v107, 0.0
  %137 = vadd.xlane.f32.xlu0 %v136
  %v138 = vpop.xlane.xlu0 %137
  %v139 = vsel %vm126, %v112, 0.0
  %140 = vadd.xlane.f32.xlu0 %v139
  %v141 = vpop.xlane.xlu0 %140
  %v142 = vsel %vm126, %v115, 0.0
  %143 = vadd.xlane.f32.xlu0 %v142
  %v144 = vpop.xlane.xlu0 %143
  %v145 = vsel %vm126, %v120, 0.0
  %146 = vadd.xlane.f32.xlu0 %v145
  %v147 = vpop.xlane.xlu0 %146
  %v148 = vsel %vm126, %v123, 0.0
  %149 = vadd.xlane.f32.xlu0 %v148
  %v150 = vpop.xlane.xlu0 %149
  %v151 = vrcp.pop 32.0
  %v152 = vmul.f32 %v129, %v151
  %v153 = vmul.f32 %v132, %v151
  %v154 = vmul.f32 %v135, %v151
  %v155 = vmul.f32 %v138, %v151
  %v156 = vmul.f32 %v141, %v151
  %v157 = vmul.f32 %v144, %v151
  %v158 = vmul.f32 %v147, %v151
  %v159 = vmul.f32 %v150, %v151
  %v160 = vsub.f32 %v96, %v152
  %v161 = vsub.f32 %v99, %v153
  %v162 = vsub.f32 %v104, %v154
  %v163 = vsub.f32 %v107, %v155
  %v164 = vsub.f32 %v112, %v156
  %v165 = vsub.f32 %v115, %v157
  %v166 = vsub.f32 %v120, %v158
  %v167 = vsub.f32 %v123, %v159
  %v168 = vmul.f32 %v160, %v160
  %v169 = vmul.f32 %v161, %v161
  %v170 = vmul.f32 %v162, %v162
  %v171 = vmul.f32 %v163, %v163
  %v172 = vmul.f32 %v164, %v164
  %v173 = vmul.f32 %v165, %v165
  %v174 = vmul.f32 %v166, %v166
  %v175 = vmul.f32 %v167, %v167
  %v176 = vsel %vm126, %v168, 0.0
  %177 = vadd.xlane.f32.xlu0 %v176
  %v178 = vpop.xlane.xlu0 %177
  %v179 = vsel %vm126, %v169, 0.0
  %180 = vadd.xlane.f32.xlu0 %v179
  %v181 = vpop.xlane.xlu0 %180
  %v182 = vsel %vm126, %v170, 0.0
  %183 = vadd.xlane.f32.xlu0 %v182
  %v184 = vpop.xlane.xlu0 %183
  %v185 = vsel %vm126, %v171, 0.0
  %186 = vadd.xlane.f32.xlu0 %v185
  %v187 = vpop.xlane.xlu0 %186
  %v188 = vsel %vm126, %v172, 0.0
  %189 = vadd.xlane.f32.xlu0 %v188
  %v190 = vpop.xlane.xlu0 %189
  %v191 = vsel %vm126, %v173, 0.0
  %192 = vadd.xlane.f32.xlu0 %v191
  %v193 = vpop.xlane.xlu0 %192
  %v194 = vsel %vm126, %v174, 0.0
  %195 = vadd.xlane.f32.xlu0 %v194
  %v196 = vpop.xlane.xlu0 %195
  %v197 = vsel %vm126, %v175, 0.0
  %198 = vadd.xlane.f32.xlu0 %v197
  %v199 = vpop.xlane.xlu0 %198
  %v200 = vmul.f32 %v178, %v151
  %v201 = vmul.f32 %v181, %v151
  %v202 = vmul.f32 %v184, %v151
  %v203 = vmul.f32 %v187, %v151
  %v204 = vmul.f32 %v190, %v151
  %v205 = vmul.f32 %v193, %v151
  %v206 = vmul.f32 %v196, %v151
  %v207 = vmul.f32 %v199, %v151
  %v208 = vadd.f32 %v200, 1e-05
  %v209 = vadd.f32 %v201, 1e-05
  %v210 = vadd.f32 %v202, 1e-05
  %v211 = vadd.f32 %v203, 1e-05
  %v212 = vadd.f32 %v204, 1e-05
  %v213 = vadd.f32 %v205, 1e-05
  %v214 = vadd.f32 %v206, 1e-05
  %v215 = vadd.f32 %v207, 1e-05
  %v216 = vrsqrt.pop %v208
  %v217 = vrsqrt.pop %v209
  %v218 = vrsqrt.pop %v210
  %v219 = vrsqrt.pop %v211
  %v220 = vrsqrt.pop %v212
  %v221 = vrsqrt.pop %v213
  %v222 = vrsqrt.pop %v214
  %v223 = vrsqrt.pop %v215
  %v224 = vmul.f32 %v160, %v216
  %v225 = vmul.f32 %v161, %v217
  %v226 = vmul.f32 %v162, %v218
  %v227 = vmul.f32 %v163, %v219
  %v228 = vmul.f32 %v164, %v220
  %v229 = vmul.f32 %v165, %v221
  %v230 = vmul.f32 %v166, %v222
  %v231 = vmul.f32 %v167, %v223
  %v232 = vld [vmem:[%s3] sm:$0x1]
  %v234 = vlaneseq
  %v235 = vshrl.u32 %v234, 7
  %v236 = vsub.s32 0, %v235
  %v237 = vrot.slane %v232, %v236
  %v239 = vmul.f32 %v224, %v237
  %v240 = vmul.f32 %v225, %v237
  %v241 = vmul.f32 %v226, %v237
  %v242 = vmul.f32 %v227, %v237
  %v243 = vmul.f32 %v228, %v237
  %v244 = vmul.f32 %v229, %v237
  %v245 = vmul.f32 %v230, %v237
  %v246 = vmul.f32 %v231, %v237
  %v247 = vld [vmem:[%s4] sm:$0x1]
  %v249 = vlaneseq
  %v250 = vshrl.u32 %v249, 7
  %v251 = vsub.s32 0, %v250
  %v252 = vrot.slane %v247, %v251
  %v254 = vadd.f32 %v239, %v252
  %v255 = vadd.f32 %v240, %v252
  %v256 = vadd.f32 %v241, %v252
  %v257 = vadd.f32 %v242, %v252
  %v258 = vadd.f32 %v243, %v252
  %v259 = vadd.f32 %v244, %v252
  %v260 = vadd.f32 %v245, %v252
  %v261 = vadd.f32 %v246, %v252
  %v262 = vmax.f32 %v254, 0.0
  %v263 = vmax.f32 %v255, 0.0
  %v264 = vmax.f32 %v256, 0.0
  %v265 = vmax.f32 %v257, 0.0
  %v266 = vmax.f32 %v258, 0.0
  %v267 = vmax.f32 %v259, 0.0
  %v268 = vmax.f32 %v260, 0.0
  %v269 = vmax.f32 %v261, 0.0
  %270 = vst.msk [vmem:[%s5] sm:$0xff] %vm126, %v262
  %271 = vst.msk [vmem:[%s5 + $0x8] sm:$0xff] %vm126, %v263
  %272 = vst.msk [vmem:[%s5 + $0x10] sm:$0xff] %vm126, %v264
  %273 = vst.msk [vmem:[%s5 + $0x18] sm:$0xff] %vm126, %v265
  %274 = vst.msk [vmem:[%s5 + $0x20] sm:$0xff] %vm126, %v266
  %275 = vst.msk [vmem:[%s5 + $0x28] sm:$0xff] %vm126, %v267
  %276 = vst.msk [vmem:[%s5 + $0x30] sm:$0xff] %vm126, %v268
  %277 = vst.msk [vmem:[%s5 + $0x38] sm:$0xff] %vm126, %v269
  // Predicated region
  $region22: #{tpu_custom_call.1} parent=0 // pred_check
    _
  $region23: #{tpu_custom_call.1} parent=0 // pred_check_branch
    %279 = sbr.rel (0) target = $region25
  $region24: #{tpu_custom_call.1} parent=0 // pred_region
    _
  $region25: #{tpu_custom_call.1} parent=0 // pred_fallthru
    _
  // Predicated region
  $region26: #{tpu_custom_call.1} parent=0 // pred_check
    _
  $region27: #{tpu_custom_call.1} parent=0 // pred_check_branch
    %281 = sbr.rel (0) target = $region29
  $region28: #{tpu_custom_call.1} parent=0 // pred_region
    _
  $region29: #{tpu_custom_call.1} parent=0 // pred_fallthru
    _

</llo_original>
